<compile_context>
chip_gen: v7x
topology: tpu7x:2x2x1
jax: 0.10.0
libtpu: 0.0.40
codegen_flags: <defaults>
</compile_context>

<pallas_src>
import jax
import jax.numpy as jnp
from jax.experimental import pallas as pl
from jax.experimental.pallas import tpu as pltpu


def _make_resblock_kernel(N, C, H, W, eps):
    L = H * W
    NL = N * L
    inv_L = 1.0 / L
    # tap order t = dh*3 + dw ; flat-offset of the tap inside one image row-major
    offsets = [(dh - 1) * W + (dw - 1) for dh in range(3) for dw in range(3)]

    def kernel(x_ref, w1_ref, w2_ref, mask_ref, out_ref):
        # x_ref    : (C, N*L)   batch folded into the lane axis (n-major)
        # w*_ref   : (C, 9*C)   conv weights, columns ordered (dh, dw, cin)
        # mask_ref : (9*C, N*L) per-tap edge-validity mask (rows t*C + cin)
        # out_ref  : (C, N*L)
        x = x_ref[...]                       # residual / conv1 input
        mask = mask_ref[...]                 # loaded once, reused by both convs

        def conv3x3(z, w_ref):
            # Build the (9C, NL) im2col operand entirely in registers: each tap
            # is a cyclic lane rotation of z (XLU), edge-crossing positions are
            # zeroed by the precomputed mask, then one MXU matmul with K = 9C.
            taps = []
            for off in offsets:
                if off == 0:
                    taps.append(z)
                else:
                    taps.append(pltpu.roll(z, shift=(-off) % NL, axis=1))
            col = jnp.concatenate(taps, axis=0) * mask          # (9C, NL)
            return jnp.dot(w_ref[...], col,
                           preferred_element_type=jnp.float32)  # (C, NL)

        def instance_norm(z):
            # Per-(n, c) stats over each length-L lane segment (segmented
            # last-axis reduce).  Slices are 128-aligned when L % 128 == 0.
            parts = []
            for n in range(N):
                zn = z[:, n * L:(n + 1) * L]                    # (C, L)
                s1 = jnp.sum(zn, axis=1, keepdims=True)
                s2 = jnp.sum(zn * zn, axis=1, keepdims=True)
                mean = s1 * inv_L
                var = jnp.maximum(s2 * inv_L - mean * mean, 0.0)  # guard
                parts.append((zn - mean) * jax.lax.rsqrt(var + eps))
            if N == 1:
                return parts[0]
            return jnp.concatenate(parts, axis=1)               # (C, NL)

        # conv1 -> InstanceNorm -> ReLU   (conv bias omitted: IN cancels it)
        y = jnp.maximum(instance_norm(conv3x3(x, w1_ref)), 0.0)
        # conv2 -> InstanceNorm
        y2 = instance_norm(conv3x3(y, w2_ref))
        # residual add, single lane-dense full-width store
        out_ref[...] = (y2 + x).astype(out_ref.dtype)

    return kernel


def residual_block(x_nchw, w1, b1, w2, b2):
    """x_nchw: (N, C, H, W) f32.  w*: (C, C, 3, 3) PyTorch OIHW.  b*: (C,).

    b1/b2 are accepted for API parity with the PyTorch module but unused:
    InstanceNorm's per-channel mean subtraction cancels them exactly.
    """
    del b1, b2
    N, C, H, W = x_nchw.shape
    L = H * W
    NL = N * L
    eps = 1e-5

    # (N, C, H, W) -> (C, N*H*W): batch folded into the lane axis (tiny one-off
    # layout pass handled by XLA; keeps the kernel's stores lane-dense).
    x2d = jnp.transpose(x_nchw, (1, 0, 2, 3)).reshape(C, NL).astype(jnp.float32)

    # OIHW -> (C_out, 9*C_in), columns ordered (dh, dw, cin) to match col rows.
    w1_m = jnp.transpose(w1, (0, 2, 3, 1)).reshape(C, 9 * C).astype(jnp.float32)
    w2_m = jnp.transpose(w2, (0, 2, 3, 1)).reshape(C, 9 * C).astype(jnp.float32)

    # Per-tap validity mask over flattened positions (computed once, outside
    # the kernel).  Row (t*C + cin) is 1 where tap t stays inside the image.
    pos = jnp.arange(L, dtype=jnp.int32)
    hh = pos // W
    ww = pos % W
    rows = []
    for dh in range(3):
        for dw in range(3):
            ok_h = jnp.logical_and(hh + dh - 1 >= 0, hh + dh - 1 <= H - 1)
            ok_w = jnp.logical_and(ww + dw - 1 >= 0, ww + dw - 1 <= W - 1)
            rows.append(jnp.logical_and(ok_h, ok_w))
    mask9 = jnp.stack(rows).astype(jnp.float32)          # (9, L)
    mask_cols = jnp.repeat(mask9, C, axis=0)             # (9C, L), rows t*C+cin
    mask_cols = jnp.tile(mask_cols, (1, N))              # (9C, N*L)

    kernel = _make_resblock_kernel(N, C, H, W, eps)

    # Actual footprint (double-buffered blocks + register working set) plus
    # modest headroom -- ~4 MiB here; never over-reserve (v7x VMEM is 64 MiB).
    est_bytes = 4 * (
        2 * C * NL              # input block (double-buffered)
        + 2 * C * NL            # output block
        + 2 * 2 * 9 * C * C     # weight blocks
        + 2 * 9 * C * NL        # tap-mask block
        + 9 * C * NL            # col value
        + 12 * C * NL           # taps / activations / temporaries
    )
    vmem_limit = int(max(2 * est_bytes, 4 << 20))

    out_flat = pl.pallas_call(
        kernel,
        out_shape=jax.ShapeDtypeStruct((C, NL), jnp.float32),
        grid_spec=pltpu.PrefetchScalarGridSpec(
            num_scalar_prefetch=0,
            grid=(1,),                      # whole batch in one grid step
            in_specs=[
                pl.BlockSpec((C, NL), lambda i: (0, 0)),
                pl.BlockSpec((C, 9 * C), lambda i: (0, 0)),
                pl.BlockSpec((C, 9 * C), lambda i: (0, 0)),
                pl.BlockSpec((9 * C, NL), lambda i: (0, 0)),
            ],
            out_specs=pl.BlockSpec((C, NL), lambda i: (0, 0)),
        ),
        compiler_params=pltpu.CompilerParams(
            dimension_semantics=("arbitrary",),
            vmem_limit_bytes=vmem_limit),
    )(x2d, w1_m, w2_m, mask_cols)

    # (C, N*H*W) -> (N, C, H, W)
    return jnp.transpose(out_flat.reshape(C, N, H, W), (1, 0, 2, 3))


def _reference(x_nchw, w1, b1, w2, b2):
    """Pure-JAX reference matching PyTorch semantics (NCHW / OIHW, with bias)."""
    eps = 1e-5

    def conv(x, w, b):
        y = jax.lax.conv_general_dilated(
            x, w, window_strides=(1, 1), padding=((1, 1), (1, 1)),
            dimension_numbers=("NCHW", "OIHW", "NCHW"))
        return y + b[None, :, None, None]

    def inorm(x):
        m = jnp.mean(x, axis=(2, 3), keepdims=True)
        v = jnp.mean((x - m) ** 2, axis=(2, 3), keepdims=True)
        return (x - m) / jnp.sqrt(v + eps)

    h = jnp.maximum(inorm(conv(x_nchw, w1, b1)), 0.0)
    h = inorm(conv(h, w2, b2))
    return h + x_nchw


if __name__ == "__main__":
    N, C, H, W = 2, 4, 16, 16

    key = jax.random.PRNGKey(0)
    kx, kw1, kb1, kw2, kb2 = jax.random.split(key, 5)

    x = jax.random.normal(kx, (N, C, H, W), dtype=jnp.float32)
    # shapes from nn.Conv2d(C, C, 3, 1, 1)
    w1 = jax.random.normal(kw1, (C, C, 3, 3), dtype=jnp.float32) * 0.1
    b1 = jax.random.normal(kb1, (C,), dtype=jnp.float32) * 0.1
    w2 = jax.random.normal(kw2, (C, C, 3, 3), dtype=jnp.float32) * 0.1
    b2 = jax.random.normal(kb2, (C,), dtype=jnp.float32) * 0.1

    out = residual_block(x, w1, b1, w2, b2)
    out = jax.block_until_ready(out)

    ref = _reference(x, w1, b1, w2, b2)
    assert out.shape == (N, C, H, W)
    err = jnp.max(jnp.abs(out - ref))
    assert jnp.allclose(out, ref, atol=1e-3, rtol=1e-3), f"max abs err {err}"

    print("KERNEL_OK")
</pallas_src>

<mosaic_0001>
module attributes {stable_mosaic.version = 11 : i64} {
  func.func @kernel(%arg0: i32, %arg1: memref<4x512xf32, #tpu.memory_space<vmem>>, %arg2: memref<4x36xf32, #tpu.memory_space<vmem>>, %arg3: memref<4x36xf32, #tpu.memory_space<vmem>>, %arg4: memref<36x512xf32, #tpu.memory_space<vmem>>, %arg5: memref<4x512xf32, #tpu.memory_space<vmem>>) attributes {dimension_semantics = [#tpu.dimension_semantics<arbitrary>], iteration_bounds = array<i64: 1>, scalar_prefetch = 0 : i64, scratch_operands = 0 : i64, tpu.core_type = #tpu.core_type<tc>, window_params = [{pipeline_mode = #tpu.pipeline_mode<synchronous>, transform_indices = @transform_0, window_bounds = array<i64: 4, 512>}, {pipeline_mode = #tpu.pipeline_mode<synchronous>, transform_indices = @transform_1, window_bounds = array<i64: 4, 36>}, {pipeline_mode = #tpu.pipeline_mode<synchronous>, transform_indices = @transform_2, window_bounds = array<i64: 4, 36>}, {pipeline_mode = #tpu.pipeline_mode<synchronous>, transform_indices = @transform_3, window_bounds = array<i64: 36, 512>}, {pipeline_mode = #tpu.pipeline_mode<synchronous>, transform_indices = @transform_4, window_bounds = array<i64: 4, 512>}]} {
    %c0 = arith.constant 0 : index
    %c0_0 = arith.constant 0 : index
    %0 = vector.load %arg1[%c0, %c0_0] : memref<4x512xf32, #tpu.memory_space<vmem>>, vector<4x512xf32>
    %c0_1 = arith.constant 0 : index
    %c0_2 = arith.constant 0 : index
    %1 = vector.load %arg4[%c0_1, %c0_2] : memref<36x512xf32, #tpu.memory_space<vmem>>, vector<36x512xf32>
    %c17_i32 = arith.constant 17 : i32
    %2 = tpu.dynamic_rotate %0 by %c17_i32 dim 1 : vector<4x512xf32>, i32 -> vector<4x512xf32>
    %c16_i32 = arith.constant 16 : i32
    %3 = tpu.dynamic_rotate %0 by %c16_i32 dim 1 : vector<4x512xf32>, i32 -> vector<4x512xf32>
    %c15_i32 = arith.constant 15 : i32
    %4 = tpu.dynamic_rotate %0 by %c15_i32 dim 1 : vector<4x512xf32>, i32 -> vector<4x512xf32>
    %c1_i32 = arith.constant 1 : i32
    %5 = tpu.dynamic_rotate %0 by %c1_i32 dim 1 : vector<4x512xf32>, i32 -> vector<4x512xf32>
    %c511_i32 = arith.constant 511 : i32
    %6 = tpu.dynamic_rotate %0 by %c511_i32 dim 1 : vector<4x512xf32>, i32 -> vector<4x512xf32>
    %c497_i32 = arith.constant 497 : i32
    %7 = tpu.dynamic_rotate %0 by %c497_i32 dim 1 : vector<4x512xf32>, i32 -> vector<4x512xf32>
    %c496_i32 = arith.constant 496 : i32
    %8 = tpu.dynamic_rotate %0 by %c496_i32 dim 1 : vector<4x512xf32>, i32 -> vector<4x512xf32>
    %c495_i32 = arith.constant 495 : i32
    %9 = tpu.dynamic_rotate %0 by %c495_i32 dim 1 : vector<4x512xf32>, i32 -> vector<4x512xf32>
    %10 = tpu.concatenate %2, %3, %4, %5, %0, %6, %7, %8, %9 in 0 : vector<4x512xf32>, vector<4x512xf32>, vector<4x512xf32>, vector<4x512xf32>, vector<4x512xf32>, vector<4x512xf32>, vector<4x512xf32>, vector<4x512xf32>, vector<4x512xf32> -> vector<36x512xf32>
    %11 = arith.mulf %10, %1 : vector<36x512xf32>
    %c0_3 = arith.constant 0 : index
    %c0_4 = arith.constant 0 : index
    %12 = vector.load %arg2[%c0_3, %c0_4] : memref<4x36xf32, #tpu.memory_space<vmem>>, vector<4x36xf32>
    %cst = arith.constant dense<0.000000e+00> : vector<4x512xf32>
    %13 = tpu.matmul %12, %11, %cst {dimension_numbers = #tpu.dot_dimension_numbers<[1], [0], [0], [1], [0, 0, 1, 1], [], []>} : vector<4x36xf32>, vector<36x512xf32>, vector<4x512xf32> -> vector<4x512xf32>
    %14 = vector.extract_strided_slice %13 {offsets = [0, 0], sizes = [4, 256], strides = [1, 1]} : vector<4x512xf32> to vector<4x256xf32>
    %cst_5 = arith.constant dense<0.000000e+00> : vector<4xf32>
    %15 = vector.multi_reduction <add>, %14, %cst_5 [1] : vector<4x256xf32> to vector<4xf32>
    %16 = vector.shape_cast %15 : vector<4xf32> to vector<4x1xf32>
    %17 = arith.mulf %14, %14 : vector<4x256xf32>
    %cst_6 = arith.constant dense<0.000000e+00> : vector<4xf32>
    %18 = vector.multi_reduction <add>, %17, %cst_6 [1] : vector<4x256xf32> to vector<4xf32>
    %19 = vector.shape_cast %18 : vector<4xf32> to vector<4x1xf32>
    %cst_7 = arith.constant 3.906250e-03 : f32
    %20 = vector.broadcast %cst_7 : f32 to vector<4x1xf32>
    %21 = arith.mulf %16, %20 : vector<4x1xf32>
    %cst_8 = arith.constant 3.906250e-03 : f32
    %22 = vector.broadcast %cst_8 : f32 to vector<4x1xf32>
    %23 = arith.mulf %19, %22 : vector<4x1xf32>
    %24 = arith.mulf %21, %21 : vector<4x1xf32>
    %25 = arith.subf %23, %24 : vector<4x1xf32>
    %cst_9 = arith.constant 0.000000e+00 : f32
    %26 = vector.broadcast %cst_9 : f32 to vector<4x1xf32>
    %27 = arith.maximumf %25, %26 : vector<4x1xf32>
    %28 = vector.broadcast %21 : vector<4x1xf32> to vector<4x256xf32>
    %29 = arith.subf %14, %28 : vector<4x256xf32>
    %cst_10 = arith.constant 9.99999974E-6 : f32
    %30 = vector.broadcast %cst_10 : f32 to vector<4x1xf32>
    %31 = arith.addf %27, %30 : vector<4x1xf32>
    %32 = math.rsqrt %31 : vector<4x1xf32>
    %33 = vector.broadcast %32 : vector<4x1xf32> to vector<4x256xf32>
    %34 = arith.mulf %29, %33 : vector<4x256xf32>
    %35 = vector.extract_strided_slice %13 {offsets = [0, 256], sizes = [4, 256], strides = [1, 1]} : vector<4x512xf32> to vector<4x256xf32>
    %cst_11 = arith.constant dense<0.000000e+00> : vector<4xf32>
    %36 = vector.multi_reduction <add>, %35, %cst_11 [1] : vector<4x256xf32> to vector<4xf32>
    %37 = vector.shape_cast %36 : vector<4xf32> to vector<4x1xf32>
    %38 = arith.mulf %35, %35 : vector<4x256xf32>
    %cst_12 = arith.constant dense<0.000000e+00> : vector<4xf32>
    %39 = vector.multi_reduction <add>, %38, %cst_12 [1] : vector<4x256xf32> to vector<4xf32>
    %40 = vector.shape_cast %39 : vector<4xf32> to vector<4x1xf32>
    %cst_13 = arith.constant 3.906250e-03 : f32
    %41 = vector.broadcast %cst_13 : f32 to vector<4x1xf32>
    %42 = arith.mulf %37, %41 : vector<4x1xf32>
    %cst_14 = arith.constant 3.906250e-03 : f32
    %43 = vector.broadcast %cst_14 : f32 to vector<4x1xf32>
    %44 = arith.mulf %40, %43 : vector<4x1xf32>
    %45 = arith.mulf %42, %42 : vector<4x1xf32>
    %46 = arith.subf %44, %45 : vector<4x1xf32>
    %cst_15 = arith.constant 0.000000e+00 : f32
    %47 = vector.broadcast %cst_15 : f32 to vector<4x1xf32>
    %48 = arith.maximumf %46, %47 : vector<4x1xf32>
    %49 = vector.broadcast %42 : vector<4x1xf32> to vector<4x256xf32>
    %50 = arith.subf %35, %49 : vector<4x256xf32>
    %cst_16 = arith.constant 9.99999974E-6 : f32
    %51 = vector.broadcast %cst_16 : f32 to vector<4x1xf32>
    %52 = arith.addf %48, %51 : vector<4x1xf32>
    %53 = math.rsqrt %52 : vector<4x1xf32>
    %54 = vector.broadcast %53 : vector<4x1xf32> to vector<4x256xf32>
    %55 = arith.mulf %50, %54 : vector<4x256xf32>
    %56 = tpu.concatenate %34, %55 in 1 : vector<4x256xf32>, vector<4x256xf32> -> vector<4x512xf32>
    %cst_17 = arith.constant 0.000000e+00 : f32
    %57 = vector.broadcast %cst_17 : f32 to vector<4x512xf32>
    %58 = arith.maximumf %56, %57 : vector<4x512xf32>
    %c17_i32_18 = arith.constant 17 : i32
    %59 = tpu.dynamic_rotate %58 by %c17_i32_18 dim 1 : vector<4x512xf32>, i32 -> vector<4x512xf32>
    %c16_i32_19 = arith.constant 16 : i32
    %60 = tpu.dynamic_rotate %58 by %c16_i32_19 dim 1 : vector<4x512xf32>, i32 -> vector<4x512xf32>
    %c15_i32_20 = arith.constant 15 : i32
    %61 = tpu.dynamic_rotate %58 by %c15_i32_20 dim 1 : vector<4x512xf32>, i32 -> vector<4x512xf32>
    %c1_i32_21 = arith.constant 1 : i32
    %62 = tpu.dynamic_rotate %58 by %c1_i32_21 dim 1 : vector<4x512xf32>, i32 -> vector<4x512xf32>
    %c511_i32_22 = arith.constant 511 : i32
    %63 = tpu.dynamic_rotate %58 by %c511_i32_22 dim 1 : vector<4x512xf32>, i32 -> vector<4x512xf32>
    %c497_i32_23 = arith.constant 497 : i32
    %64 = tpu.dynamic_rotate %58 by %c497_i32_23 dim 1 : vector<4x512xf32>, i32 -> vector<4x512xf32>
    %c496_i32_24 = arith.constant 496 : i32
    %65 = tpu.dynamic_rotate %58 by %c496_i32_24 dim 1 : vector<4x512xf32>, i32 -> vector<4x512xf32>
    %c495_i32_25 = arith.constant 495 : i32
    %66 = tpu.dynamic_rotate %58 by %c495_i32_25 dim 1 : vector<4x512xf32>, i32 -> vector<4x512xf32>
    %67 = tpu.concatenate %59, %60, %61, %62, %58, %63, %64, %65, %66 in 0 : vector<4x512xf32>, vector<4x512xf32>, vector<4x512xf32>, vector<4x512xf32>, vector<4x512xf32>, vector<4x512xf32>, vector<4x512xf32>, vector<4x512xf32>, vector<4x512xf32> -> vector<36x512xf32>
    %68 = arith.mulf %67, %1 : vector<36x512xf32>
    %c0_26 = arith.constant 0 : index
    %c0_27 = arith.constant 0 : index
    %69 = vector.load %arg3[%c0_26, %c0_27] : memref<4x36xf32, #tpu.memory_space<vmem>>, vector<4x36xf32>
    %cst_28 = arith.constant dense<0.000000e+00> : vector<4x512xf32>
    %70 = tpu.matmul %69, %68, %cst_28 {dimension_numbers = #tpu.dot_dimension_numbers<[1], [0], [0], [1], [0, 0, 1, 1], [], []>} : vector<4x36xf32>, vector<36x512xf32>, vector<4x512xf32> -> vector<4x512xf32>
    %71 = vector.extract_strided_slice %70 {offsets = [0, 0], sizes = [4, 256], strides = [1, 1]} : vector<4x512xf32> to vector<4x256xf32>
    %cst_29 = arith.constant dense<0.000000e+00> : vector<4xf32>
    %72 = vector.multi_reduction <add>, %71, %cst_29 [1] : vector<4x256xf32> to vector<4xf32>
    %73 = vector.shape_cast %72 : vector<4xf32> to vector<4x1xf32>
    %74 = arith.mulf %71, %71 : vector<4x256xf32>
    %cst_30 = arith.constant dense<0.000000e+00> : vector<4xf32>
    %75 = vector.multi_reduction <add>, %74, %cst_30 [1] : vector<4x256xf32> to vector<4xf32>
    %76 = vector.shape_cast %75 : vector<4xf32> to vector<4x1xf32>
    %cst_31 = arith.constant 3.906250e-03 : f32
    %77 = vector.broadcast %cst_31 : f32 to vector<4x1xf32>
    %78 = arith.mulf %73, %77 : vector<4x1xf32>
    %cst_32 = arith.constant 3.906250e-03 : f32
    %79 = vector.broadcast %cst_32 : f32 to vector<4x1xf32>
    %80 = arith.mulf %76, %79 : vector<4x1xf32>
    %81 = arith.mulf %78, %78 : vector<4x1xf32>
    %82 = arith.subf %80, %81 : vector<4x1xf32>
    %cst_33 = arith.constant 0.000000e+00 : f32
    %83 = vector.broadcast %cst_33 : f32 to vector<4x1xf32>
    %84 = arith.maximumf %82, %83 : vector<4x1xf32>
    %85 = vector.broadcast %78 : vector<4x1xf32> to vector<4x256xf32>
    %86 = arith.subf %71, %85 : vector<4x256xf32>
    %cst_34 = arith.constant 9.99999974E-6 : f32
    %87 = vector.broadcast %cst_34 : f32 to vector<4x1xf32>
    %88 = arith.addf %84, %87 : vector<4x1xf32>
    %89 = math.rsqrt %88 : vector<4x1xf32>
    %90 = vector.broadcast %89 : vector<4x1xf32> to vector<4x256xf32>
    %91 = arith.mulf %86, %90 : vector<4x256xf32>
    %92 = vector.extract_strided_slice %70 {offsets = [0, 256], sizes = [4, 256], strides = [1, 1]} : vector<4x512xf32> to vector<4x256xf32>
    %cst_35 = arith.constant dense<0.000000e+00> : vector<4xf32>
    %93 = vector.multi_reduction <add>, %92, %cst_35 [1] : vector<4x256xf32> to vector<4xf32>
    %94 = vector.shape_cast %93 : vector<4xf32> to vector<4x1xf32>
    %95 = arith.mulf %92, %92 : vector<4x256xf32>
    %cst_36 = arith.constant dense<0.000000e+00> : vector<4xf32>
    %96 = vector.multi_reduction <add>, %95, %cst_36 [1] : vector<4x256xf32> to vector<4xf32>
    %97 = vector.shape_cast %96 : vector<4xf32> to vector<4x1xf32>
    %cst_37 = arith.constant 3.906250e-03 : f32
    %98 = vector.broadcast %cst_37 : f32 to vector<4x1xf32>
    %99 = arith.mulf %94, %98 : vector<4x1xf32>
    %cst_38 = arith.constant 3.906250e-03 : f32
    %100 = vector.broadcast %cst_38 : f32 to vector<4x1xf32>
    %101 = arith.mulf %97, %100 : vector<4x1xf32>
    %102 = arith.mulf %99, %99 : vector<4x1xf32>
    %103 = arith.subf %101, %102 : vector<4x1xf32>
    %cst_39 = arith.constant 0.000000e+00 : f32
    %104 = vector.broadcast %cst_39 : f32 to vector<4x1xf32>
    %105 = arith.maximumf %103, %104 : vector<4x1xf32>
    %106 = vector.broadcast %99 : vector<4x1xf32> to vector<4x256xf32>
    %107 = arith.subf %92, %106 : vector<4x256xf32>
    %cst_40 = arith.constant 9.99999974E-6 : f32
    %108 = vector.broadcast %cst_40 : f32 to vector<4x1xf32>
    %109 = arith.addf %105, %108 : vector<4x1xf32>
    %110 = math.rsqrt %109 : vector<4x1xf32>
    %111 = vector.broadcast %110 : vector<4x1xf32> to vector<4x256xf32>
    %112 = arith.mulf %107, %111 : vector<4x256xf32>
    %113 = tpu.concatenate %91, %112 in 1 : vector<4x256xf32>, vector<4x256xf32> -> vector<4x512xf32>
    %114 = arith.addf %113, %0 : vector<4x512xf32>
    %c0_41 = arith.constant 0 : index
    %c0_42 = arith.constant 0 : index
    %115 = vector.load %arg5[%c0_41, %c0_42] : memref<4x512xf32, #tpu.memory_space<vmem>>, vector<4x512xf32>
    tpu.vector_store %arg5[%c0_41, %c0_42], %114 {strides = array<i32>} : memref<4x512xf32, #tpu.memory_space<vmem>>, vector<4x512xf32>,
    return
  }
  func.func @transform_0(%arg0: i32) -> (i32, i32) {
    %c0_i32 = arith.constant 0 : i32
    %c0_i32_0 = arith.constant 0 : i32
    %c0_i32_1 = arith.constant 0 : i32
    return %c0_i32, %c0_i32_0 : i32, i32
  }
  func.func @transform_1(%arg0: i32) -> (i32, i32) {
    %c0_i32 = arith.constant 0 : i32
    %c0_i32_0 = arith.constant 0 : i32
    %c0_i32_1 = arith.constant 0 : i32
    return %c0_i32, %c0_i32_0 : i32, i32
  }
  func.func @transform_2(%arg0: i32) -> (i32, i32) {
    %c0_i32 = arith.constant 0 : i32
    %c0_i32_0 = arith.constant 0 : i32
    %c0_i32_1 = arith.constant 0 : i32
    return %c0_i32, %c0_i32_0 : i32, i32
  }
  func.func @transform_3(%arg0: i32) -> (i32, i32) {
    %c0_i32 = arith.constant 0 : i32
    %c0_i32_0 = arith.constant 0 : i32
    %c0_i32_1 = arith.constant 0 : i32
    return %c0_i32, %c0_i32_0 : i32, i32
  }
  func.func @transform_4(%arg0: i32) -> (i32, i32) {
    %c0_i32 = arith.constant 0 : i32
    %c0_i32_0 = arith.constant 0 : i32
    %c0_i32_1 = arith.constant 0 : i32
    return %c0_i32, %c0_i32_0 : i32, i32
  }
}

</mosaic_0001>

<llo_original>
// kernel: tpu_custom_call.1
$region0: #{tpu_custom_call.1}
  #allocation0 [shape = 'u32[]', space=smem, size = 0x4, offset = 0x4, fixed_abs, tag = 'smem constant byte address 0x4 - core index']
  #allocation1 [shape = 'u32[144,128]{1,0:T(1,128)}', space=vmem, size = 0x12000, scoped, tag = 'internal scratch']
  %s0 = inlined_call_operand.hbm [shape: f32[4,512], index: 0, kind: input, shape index: {}]
  %s1 = inlined_call_operand.hbm [shape: f32[4,36], index: 1, kind: input, shape index: {}]
  %s2 = inlined_call_operand.vmem [shape: f32[4,36], index: 2, kind: input, shape index: {}]
  %s3 = inlined_call_operand.hbm [shape: f32[36,512], index: 3, kind: input, shape index: {}]
  %s4 = inlined_call_operand.hbm [shape: f32[4,512], index: 4, kind: output, shape index: {}]
  %s5 = sld [smem:[#allocation0]]
  $region38: #{tpu_custom_call.1} parent=0
    _
  %s7 = ssub.s32 1, %s5
  %s8 = scalar_select 0, %s7, %s5
  $region1: #{tpu_custom_call.1} parent=0
    #allocation2 [shape = 'u8[8192]{0}', space=vmem, size = 0x2000, scoped, tag = 'input window, operand 0, single buffered']
    #allocation3 [shape = 's32[1]{0}', space=sflag, size = 0x4, scoped, tag = 'scoped memory for tpu_custom_call.1']
    #allocation4 [shape = 's32[1]{0}', space=sflag, size = 0x4, scoped, tag = 'scoped memory for tpu_custom_call.1']
    #allocation5 [shape = 'u8[2048]{0}', space=vmem, size = 0x800, scoped, tag = 'input window, operand 1, single buffered']
    #allocation6 [shape = 's32[1]{0}', space=sflag, size = 0x4, scoped, tag = 'scoped memory for tpu_custom_call.1']
    #allocation7 [shape = 'u8[81920]{0}', space=vmem, size = 0x14000, scoped, tag = 'input window, operand 3, single buffered']
    #allocation8 [shape = 'u8[8192]{0}', space=vmem, size = 0x2000, scoped, tag = 'output window, operand 0, single buffered']
    %9 = vsyncpa [#allocation3], 0
    %10 = vsyncpa [#allocation6], 0
    %11 = vsyncpa [#allocation4], 0
    // Predicated region
    $region2: #{tpu_custom_call.1} parent=1 // pred_check
      _
    $region3: #{tpu_custom_call.1} parent=1 // pred_check_branch
      %13 = sbr.rel (0) target = $region5
    $region4: #{tpu_custom_call.1} parent=1 // pred_region
      %s15 = ssub.s32 256, 256
      %16 = vsyncadd [#allocation3], %s15
      %s18 = sshll.u32 [#allocation2], 4
      %s19 = int_to_ptr.vmem [resolvable:$true] %s18
      %21 = dma.hbm_to_vmem [thread:$0]  %s0, 256, %s19, [#allocation3]
    $region5: #{tpu_custom_call.1} parent=1 // pred_fallthru
      _
    // Predicated region
    $region6: #{tpu_custom_call.1} parent=1 // pred_check
      _
    $region7: #{tpu_custom_call.1} parent=1 // pred_check_branch
      %23 = sbr.rel (0) target = $region9
    $region8: #{tpu_custom_call.1} parent=1 // pred_region
      %s25 = ssub.s32 64, 64
      %26 = vsyncadd [#allocation6], %s25
      %s28 = sshll.u32 [#allocation5], 4
      %s29 = int_to_ptr.vmem [resolvable:$true] %s28
      %31 = dma.hbm_to_vmem [thread:$0]  %s1, 64, %s29, [#allocation6]
    $region9: #{tpu_custom_call.1} parent=1 // pred_fallthru
      _
    // Predicated region
    $region10: #{tpu_custom_call.1} parent=1 // pred_check
      _
    $region11: #{tpu_custom_call.1} parent=1 // pred_check_branch
      %33 = sbr.rel (0) target = $region13
    $region12: #{tpu_custom_call.1} parent=1 // pred_region
      _
    $region13: #{tpu_custom_call.1} parent=1 // pred_fallthru
      _
    // Predicated region
    $region14: #{tpu_custom_call.1} parent=1 // pred_check
      _
    $region15: #{tpu_custom_call.1} parent=1 // pred_check_branch
      %35 = sbr.rel (0) target = $region17
    $region16: #{tpu_custom_call.1} parent=1 // pred_region
      %s37 = ssub.s32 2560, 2560
      %38 = vsyncadd [#allocation6], %s37
      %s39 = sshll.u32 [#allocation7], 4
      %s40 = int_to_ptr.vmem [resolvable:$true] %s39
      %45 = dma.hbm_to_vmem [thread:$0]  %s3, 2560, %s40, [#allocation6], 512, 512, 32
    $region17: #{tpu_custom_call.1} parent=1 // pred_fallthru
      _
    // Predicated region
    $region18: #{tpu_custom_call.1} parent=1 // pred_check
      _
    $region19: #{tpu_custom_call.1} parent=1 // pred_check_branch
      %47 = sbr.rel (0) target = $region21
    $region20: #{tpu_custom_call.1} parent=1 // pred_region
      %48 = dma.done [#allocation3], 256
    $region21: #{tpu_custom_call.1} parent=1 // pred_fallthru
      _
    // Predicated region
    $region22: #{tpu_custom_call.1} parent=1 // pred_check
      _
    $region23: #{tpu_custom_call.1} parent=1 // pred_check_branch
      %50 = sbr.rel (0) target = $region25
    $region24: #{tpu_custom_call.1} parent=1 // pred_region
      %51 = dma.done [#allocation6], 64
    $region25: #{tpu_custom_call.1} parent=1 // pred_fallthru
      _
    // Predicated region
    $region26: #{tpu_custom_call.1} parent=1 // pred_check
      _
    $region27: #{tpu_custom_call.1} parent=1 // pred_check_branch
      %53 = sbr.rel (0) target = $region29
    $region28: #{tpu_custom_call.1} parent=1 // pred_region
      %54 = dma.done [#allocation6], 2560
    $region29: #{tpu_custom_call.1} parent=1 // pred_fallthru
      _
    %v55 = vld [vmem:[#allocation2] sm:$0xff]
    %v56 = vld [vmem:[#allocation2 + $0x8] sm:$0xff]
    %v57 = vld [vmem:[#allocation7] sm:$0xff]
    %v58 = vld [vmem:[#allocation7 + $0x8] sm:$0xff]
    %v59 = vld [vmem:[#allocation7 + $0x10] sm:$0xff]
    %v60 = vld [vmem:[#allocation7 + $0x18] sm:$0xff]
    %v61 = vld [vmem:[#allocation7 + $0x20] sm:$0xff]
    %v62 = vld [vmem:[#allocation7 + $0x28] sm:$0xff]
    %v63 = vld [vmem:[#allocation7 + $0x30] sm:$0xff]
    %v64 = vld [vmem:[#allocation7 + $0x38] sm:$0xff]
    %v65 = vld [vmem:[#allocation7 + $0x40] sm:$0xff]
    %v66 = vld [vmem:[#allocation7 + $0x48] sm:$0xff]
    %v67 = vld [vmem:[#allocation7 + $0x50] sm:$0xff]
    %v68 = vld [vmem:[#allocation7 + $0x58] sm:$0xff]
    %v69 = vld [vmem:[#allocation7 + $0x60] sm:$0xff]
    %v70 = vld [vmem:[#allocation7 + $0x68] sm:$0xff]
    %v71 = vld [vmem:[#allocation7 + $0x70] sm:$0xff]
    %v72 = vld [vmem:[#allocation7 + $0x78] sm:$0xff]
    %v73 = vld [vmem:[#allocation7 + $0x80] sm:$0xf]
    %v74 = vld [vmem:[#allocation7 + $0x88] sm:$0xf]
    %v75 = vld [vmem:[#allocation7 + $0x90] sm:$0xf]
    %v76 = vld [vmem:[#allocation7 + $0x98] sm:$0xf]
    %v79 = vcombine.high %v55, %v55
    %v80 = vcombine.high %v56, %v56
    %83 = vrot.lane.b32.xlu0 %v55, 17
    %v84 = vpop.permute.xlu0 %83
    %85 = vrot.lane.b32.xlu0 %v79, 17
    %v86 = vpop.permute.xlu0 %85
    %87 = vrot.lane.b32.xlu0 %v56, 17
    %v88 = vpop.permute.xlu0 %87
    %89 = vrot.lane.b32.xlu0 %v80, 17
    %v90 = vpop.permute.xlu0 %89
    %v91 = vlaneseq
    %v92 = vand.u32 %v91, 127
    %vm93 = vcmp.lt.s32.totalorder %v92, 17
    %v94 = vsel %vm93, %v88, %v90
    %v95 = vsel %vm93, %v86, %v88
    %v96 = vsel %vm93, %v84, %v86
    %v97 = vsel %vm93, %v90, %v84
    %98 = vrot.lane.b32.xlu0 %v55, 16
    %v99 = vpop.permute.xlu0 %98
    %100 = vrot.lane.b32.xlu0 %v79, 16
    %v101 = vpop.permute.xlu0 %100
    %102 = vrot.lane.b32.xlu0 %v56, 16
    %v103 = vpop.permute.xlu0 %102
    %104 = vrot.lane.b32.xlu0 %v80, 16
    %v105 = vpop.permute.xlu0 %104
    %vm106 = vcmp.lt.s32.totalorder %v92, 16
    %v107 = vsel %vm106, %v103, %v105
    %v108 = vsel %vm106, %v101, %v103
    %v109 = vsel %vm106, %v99, %v101
    %v110 = vsel %vm106, %v105, %v99
    %111 = vrot.lane.b32.xlu0 %v55, 15
    %v112 = vpop.permute.xlu0 %111
    %113 = vrot.lane.b32.xlu0 %v79, 15
    %v114 = vpop.permute.xlu0 %113
    %115 = vrot.lane.b32.xlu0 %v56, 15
    %v116 = vpop.permute.xlu0 %115
    %117 = vrot.lane.b32.xlu0 %v80, 15
    %v118 = vpop.permute.xlu0 %117
    %vm119 = vcmp.lt.s32.totalorder %v92, 15
    %v120 = vsel %vm119, %v116, %v118
    %v121 = vsel %vm119, %v114, %v116
    %v122 = vsel %vm119, %v112, %v114
    %v123 = vsel %vm119, %v118, %v112
    %124 = vrot.lane.b32.xlu0 %v55, 1
    %v125 = vpop.permute.xlu0 %124
    %126 = vrot.lane.b32.xlu0 %v79, 1
    %v127 = vpop.permute.xlu0 %126
    %128 = vrot.lane.b32.xlu0 %v56, 1
    %v129 = vpop.permute.xlu0 %128
    %130 = vrot.lane.b32.xlu0 %v80, 1
    %v131 = vpop.permute.xlu0 %130
    %vm132 = vcmp.lt.s32.totalorder %v92, 1
    %v133 = vsel %vm132, %v129, %v131
    %v134 = vsel %vm132, %v127, %v129
    %v135 = vsel %vm132, %v125, %v127
    %v136 = vsel %vm132, %v131, %v125
    %137 = vrot.lane.b32.xlu0 %v55, 127
    %v138 = vpop.permute.xlu0 %137
    %139 = vrot.lane.b32.xlu0 %v79, 127
    %v140 = vpop.permute.xlu0 %139
    %141 = vrot.lane.b32.xlu0 %v56, 127
    %v142 = vpop.permute.xlu0 %141
    %143 = vrot.lane.b32.xlu0 %v80, 127
    %v144 = vpop.permute.xlu0 %143
    %vm145 = vcmp.lt.s32.totalorder %v92, 127
    %v146 = vsel %vm145, %v142, %v144
    %v147 = vsel %vm145, %v140, %v142
    %v148 = vsel %vm145, %v138, %v140
    %v149 = vsel %vm145, %v144, %v138
    %150 = vrot.lane.b32.xlu0 %v55, 113
    %v151 = vpop.permute.xlu0 %150
    %152 = vrot.lane.b32.xlu0 %v79, 113
    %v153 = vpop.permute.xlu0 %152
    %154 = vrot.lane.b32.xlu0 %v56, 113
    %v155 = vpop.permute.xlu0 %154
    %156 = vrot.lane.b32.xlu0 %v80, 113
    %v157 = vpop.permute.xlu0 %156
    %vm158 = vcmp.lt.s32.totalorder %v92, 113
    %v159 = vsel %vm158, %v155, %v157
    %v160 = vsel %vm158, %v153, %v155
    %v161 = vsel %vm158, %v151, %v153
    %v162 = vsel %vm158, %v157, %v151
    %163 = vrot.lane.b32.xlu0 %v55, 112
    %v164 = vpop.permute.xlu0 %163
    %165 = vrot.lane.b32.xlu0 %v79, 112
    %v166 = vpop.permute.xlu0 %165
    %167 = vrot.lane.b32.xlu0 %v56, 112
    %v168 = vpop.permute.xlu0 %167
    %169 = vrot.lane.b32.xlu0 %v80, 112
    %v170 = vpop.permute.xlu0 %169
    %vm171 = vcmp.lt.s32.totalorder %v92, 112
    %v172 = vsel %vm171, %v168, %v170
    %v173 = vsel %vm171, %v166, %v168
    %v174 = vsel %vm171, %v164, %v166
    %v175 = vsel %vm171, %v170, %v164
    %176 = vrot.lane.b32.xlu0 %v55, 111
    %v177 = vpop.permute.xlu0 %176
    %178 = vrot.lane.b32.xlu0 %v79, 111
    %v179 = vpop.permute.xlu0 %178
    %180 = vrot.lane.b32.xlu0 %v56, 111
    %v181 = vpop.permute.xlu0 %180
    %182 = vrot.lane.b32.xlu0 %v80, 111
    %v183 = vpop.permute.xlu0 %182
    %vm184 = vcmp.lt.s32.totalorder %v92, 111
    %v185 = vsel %vm184, %v181, %v183
    %v186 = vsel %vm184, %v179, %v181
    %v187 = vsel %vm184, %v177, %v179
    %v188 = vsel %vm184, %v183, %v177
    %v193 = vrot.slane %v110, 4
    %v194 = vrot.slane %v109, 4
    %v195 = vrot.slane %v108, 4
    %v196 = vrot.slane %v107, 4
    %v205 = vrot.slane %v136, 4
    %v206 = vrot.slane %v135, 4
    %v207 = vrot.slane %v134, 4
    %v208 = vrot.slane %v133, 4
    %v217 = vrot.slane %v148, 4
    %v218 = vrot.slane %v147, 4
    %v219 = vrot.slane %v146, 4
    %v220 = vrot.slane %v149, 4
    %v229 = vrot.slane %v174, 4
    %v230 = vrot.slane %v173, 4
    %v231 = vrot.slane %v172, 4
    %v232 = vrot.slane %v175, 4
    %vm237 = vcmask 1043456
    %v238 = vsel %vm237, %v97, %v193
    %v239 = vsel %vm237, %v96, %v194
    %v240 = vsel %vm237, %v95, %v195
    %v241 = vsel %vm237, %v94, %v196
    %v242 = vsel %vm237, %v123, %v205
    %v243 = vsel %vm237, %v122, %v206
    %v244 = vsel %vm237, %v121, %v207
    %v245 = vsel %vm237, %v120, %v208
    %v246 = vsel %vm237, %v55, %v217
    %v247 = vsel %vm237, %v79, %v218
    %v248 = vsel %vm237, %v56, %v219
    %v249 = vsel %vm237, %v80, %v220
    %v250 = vsel %vm237, %v161, %v229
    %v251 = vsel %vm237, %v160, %v230
    %v252 = vsel %vm237, %v159, %v231
    %v253 = vsel %vm237, %v162, %v232
    %v254 = vmul.f32 %v238, %v57
    %v255 = vmul.f32 %v239, %v58
    %v256 = vmul.f32 %v240, %v59
    %v257 = vmul.f32 %v241, %v60
    %v258 = vmul.f32 %v242, %v61
    %v259 = vmul.f32 %v243, %v62
    %v260 = vmul.f32 %v244, %v63
    %v261 = vmul.f32 %v245, %v64
    %v262 = vmul.f32 %v246, %v65
    %v263 = vmul.f32 %v247, %v66
    %v264 = vmul.f32 %v248, %v67
    %v265 = vmul.f32 %v249, %v68
    %v266 = vmul.f32 %v250, %v69
    %v267 = vmul.f32 %v251, %v70
    %v268 = vmul.f32 %v252, %v71
    %v269 = vmul.f32 %v253, %v72
    %v270 = vmul.f32 %v187, %v73
    %v271 = vmul.f32 %v186, %v74
    %v272 = vmul.f32 %v185, %v75
    %v273 = vmul.f32 %v188, %v76
    %v274 = vld [vmem:[#allocation5] sm:$0xf]
    %vm275 = vcmask 293888
    %v277 = vsel %vm275, %v274, 0
    %v280 = vsel %vm237, %v270, 0
    %v283 = vsel %vm237, %v271, 0
    %v286 = vsel %vm237, %v272, 0
    %v289 = vsel %vm237, %v273, 0
    %291 = vmatprep.subr.mxu0 %v255
    %292 = vmatpush1.msra.mxu0 %v254
    %293 = vmatprep.subr.mxu0 %v259
    %294 = vmatpush1.msra.mxu0 %v258
    %295 = vmatprep.subr.mxu0 %v263
    %296 = vmatpush1.msra.mxu0 %v262
    %297 = vmatprep.subr.mxu0 %v267
    %298 = vmatpush1.msra.mxu0 %v266
    %299 = vmatprep.subr.mxu0 %v283
    %300 = vmatpush1.msra.mxu0 %v280
    %301 = vmatprep.subr.mxu0 0.0
    %302 = vmatpush1.msra.mxu0 0.0
    %303 = vmatprep.subr.mxu0 0.0
    %304 = vmatpush1.msra.mxu0 0.0
    %305 = vmatprep.subr.mxu0 0.0
    %306 = vmatpush1.msra.mxu0 0.0
    %307 = vmatprep.subr.mxu0 0.0
    %308 = vmatpush1.msra.mxu0 0.0
    %309 = vmatprep.subr.mxu0 0.0
    %310 = vmatpush1.msra.mxu0 0.0
    %311 = vmatprep.subr.mxu0 0.0
    %312 = vmatpush1.msra.mxu0 0.0
    %313 = vmatprep.subr.mxu0 0.0
    %314 = vmatpush1.msra.mxu0 0.0
    %315 = vmatprep.subr.mxu0 0.0
    %316 = vmatpush1.msra.mxu0 0.0
    %317 = vmatprep.subr.mxu0 0.0
    %318 = vmatpush1.msra.mxu0 0.0
    %319 = vmatprep.subr.mxu0 0.0
    %320 = vmatpush1.msra.mxu0 0.0
    %321 = vmatprep.subr.mxu0 0.0
    %322 = vmatpush1.msra.mxu0 0.0
    %323 = vmatprep.subr.mxu0 0.0
    %324 = vmatpush1.msra.mxu0 0.0
    %325 = vmatprep.subr.mxu0 0.0
    %326 = vmatpush1.msra.mxu0 0.0
    %327 = vmatprep.subr.mxu0 0.0
    %328 = vmatpush1.msra.mxu0 0.0
    %329 = vmatprep.subr.mxu0 0.0
    %330 = vmatpush1.msra.mxu0 0.0
    %331 = vmatprep.subr.mxu0 0.0
    %332 = vmatpush1.msra.mxu0 0.0
    %333 = vmatprep.subr.mxu0 0.0
    %334 = vmatpush1.msra.mxu0 0.0
    %335 = vmatprep.subr.mxu0 0.0
    %336 = vmatpush1.msra.mxu0 0.0
    %337 = vmatprep.subr.mxu0 0.0
    %338 = vmatpush1.msra.mxu0 0.0
    %339 = vmatprep.subr.mxu0 0.0
    %340 = vmatpush1.msra.mxu0 0.0
    %341 = vmatprep.subr.mxu0 0.0
    %342 = vmatpush1.msra.mxu0 0.0
    %343 = vmatprep.subr.mxu0 0.0
    %344 = vmatpush1.msra.mxu0 0.0
    %345 = vmatprep.subr.mxu0 0.0
    %346 = vmatpush1.msra.mxu0 0.0
    %347 = vmatprep.subr.mxu0 0.0
    %348 = vmatpush1.msra.mxu0 0.0
    %349 = vmatprep.subr.mxu0 0.0
    %350 = vmatpush1.msra.mxu0 0.0
    %351 = vmatprep.subr.mxu0 0.0
    %352 = vmatpush1.msra.mxu0 0.0
    %353 = vmatprep.subr.mxu0 0.0
    %354 = vmatpush1.msra.mxu0 0.0
    %355 = vmatprep.mubr.f32.mxu0 0.0
    %356 = vmatmul.mubr.f32.gmra.mrb[0].mxu0 %v277
    %v357 = vpop.f32.mrb[0].mxu0
    %v358 = vadd.f32 0.0, %v357
    %v359 = vpop.f32.mrb[0].mxu0
    %v360 = vadd.f32 0.0, %v359
    %361 = vdwg.mxu0
    %362 = vmatprep.subr.mxu0 %v257
    %363 = vmatpush1.msra.mxu0 %v256
    %364 = vmatprep.subr.mxu0 %v261
    %365 = vmatpush1.msra.mxu0 %v260
    %366 = vmatprep.subr.mxu0 %v265
    %367 = vmatpush1.msra.mxu0 %v264
    %368 = vmatprep.subr.mxu0 %v269
    %369 = vmatpush1.msra.mxu0 %v268
    %370 = vmatprep.subr.mxu0 %v289
    %371 = vmatpush1.msra.mxu0 %v286
    %372 = vmatprep.subr.mxu0 0.0
    %373 = vmatpush1.msra.mxu0 0.0
    %374 = vmatprep.subr.mxu0 0.0
    %375 = vmatpush1.msra.mxu0 0.0
    %376 = vmatprep.subr.mxu0 0.0
    %377 = vmatpush1.msra.mxu0 0.0
    %378 = vmatprep.subr.mxu0 0.0
    %379 = vmatpush1.msra.mxu0 0.0
    %380 = vmatprep.subr.mxu0 0.0
    %381 = vmatpush1.msra.mxu0 0.0
    %382 = vmatprep.subr.mxu0 0.0
    %383 = vmatpush1.msra.mxu0 0.0
    %384 = vmatprep.subr.mxu0 0.0
    %385 = vmatpush1.msra.mxu0 0.0
    %386 = vmatprep.subr.mxu0 0.0
    %387 = vmatpush1.msra.mxu0 0.0
    %388 = vmatprep.subr.mxu0 0.0
    %389 = vmatpush1.msra.mxu0 0.0
    %390 = vmatprep.subr.mxu0 0.0
    %391 = vmatpush1.msra.mxu0 0.0
    %392 = vmatprep.subr.mxu0 0.0
    %393 = vmatpush1.msra.mxu0 0.0
    %394 = vmatprep.subr.mxu0 0.0
    %395 = vmatpush1.msra.mxu0 0.0
    %396 = vmatprep.subr.mxu0 0.0
    %397 = vmatpush1.msra.mxu0 0.0
    %398 = vmatprep.subr.mxu0 0.0
    %399 = vmatpush1.msra.mxu0 0.0
    %400 = vmatprep.subr.mxu0 0.0
    %401 = vmatpush1.msra.mxu0 0.0
    %402 = vmatprep.subr.mxu0 0.0
    %403 = vmatpush1.msra.mxu0 0.0
    %404 = vmatprep.subr.mxu0 0.0
    %405 = vmatpush1.msra.mxu0 0.0
    %406 = vmatprep.subr.mxu0 0.0
    %407 = vmatpush1.msra.mxu0 0.0
    %408 = vmatprep.subr.mxu0 0.0
    %409 = vmatpush1.msra.mxu0 0.0
    %410 = vmatprep.subr.mxu0 0.0
    %411 = vmatpush1.msra.mxu0 0.0
    %412 = vmatprep.subr.mxu0 0.0
    %413 = vmatpush1.msra.mxu0 0.0
    %414 = vmatprep.subr.mxu0 0.0
    %415 = vmatpush1.msra.mxu0 0.0
    %416 = vmatprep.subr.mxu0 0.0
    %417 = vmatpush1.msra.mxu0 0.0
    %418 = vmatprep.subr.mxu0 0.0
    %419 = vmatpush1.msra.mxu0 0.0
    %420 = vmatprep.subr.mxu0 0.0
    %421 = vmatpush1.msra.mxu0 0.0
    %422 = vmatprep.subr.mxu0 0.0
    %423 = vmatpush1.msra.mxu0 0.0
    %424 = vmatprep.subr.mxu0 0.0
    %425 = vmatpush1.msra.mxu0 0.0
    %426 = vmatprep.mubr.f32.mxu0 0.0
    %427 = vmatmul.mubr.f32.gmra.mrb[0].mxu0 %v277
    %v428 = vpop.f32.mrb[0].mxu0
    %v429 = vadd.f32 0.0, %v428
    %v430 = vpop.f32.mrb[0].mxu0
    %v431 = vadd.f32 0.0, %v430
    %432 = vdwg.mxu0
    %v433 = vsel %vm237, %v358, 0.0
    %v434 = vsel %vm237, %v360, 0.0
    %v435 = vadd.f32 %v433, %v434
    %436 = vadd.xlane.f32.xlu0 %v435
    %v437 = vpop.xlane.xlu0 %436
    %v438 = vmul.f32 %v358, %v358
    %v439 = vmul.f32 %v360, %v360
    %v440 = vsel %vm237, %v438, 0.0
    %v441 = vsel %vm237, %v439, 0.0
    %v442 = vadd.f32 %v440, %v441
    %443 = vadd.xlane.f32.xlu0 %v442
    %v444 = vpop.xlane.xlu0 %443
    %v445 = vmul.f32 %v437, 0.00390625
    %v446 = vmul.f32 %v444, 0.00390625
    %v447 = vmul.f32 %v445, %v445
    %v448 = vsub.f32 %v446, %v447
    %v449 = vmax.f32 %v448, 0.0
    %v450 = vsub.f32 %v358, %v445
    %v451 = vsub.f32 %v360, %v445
    %v452 = vadd.f32 %v449, 1e-05
    %v453 = vrsqrt.pop %v452
    %v454 = vmul.f32 %v450, %v453
    %v455 = vmul.f32 %v451, %v453
    %v456 = vsel %vm237, %v429, 0.0
    %v457 = vsel %vm237, %v431, 0.0
    %v458 = vadd.f32 %v456, %v457
    %459 = vadd.xlane.f32.xlu0 %v458
    %v460 = vpop.xlane.xlu0 %459
    %v461 = vmul.f32 %v429, %v429
    %v462 = vmul.f32 %v431, %v431
    %v463 = vsel %vm237, %v461, 0.0
    %v464 = vsel %vm237, %v462, 0.0
    %v465 = vadd.f32 %v463, %v464
    %466 = vadd.xlane.f32.xlu0 %v465
    %v467 = vpop.xlane.xlu0 %466
    %v468 = vmul.f32 %v460, 0.00390625
    %v469 = vmul.f32 %v467, 0.00390625
    %v470 = vmul.f32 %v468, %v468
    %v471 = vsub.f32 %v469, %v470
    %v472 = vmax.f32 %v471, 0.0
    %v473 = vsub.f32 %v429, %v468
    %v474 = vsub.f32 %v431, %v468
    %v475 = vadd.f32 %v472, 1e-05
    %v476 = vrsqrt.pop %v475
    %v477 = vmul.f32 %v473, %v476
    %v478 = vmul.f32 %v474, %v476
    %v479 = vmax.f32 %v454, 0.0
    %v480 = vmax.f32 %v455, 0.0
    %v481 = vmax.f32 %v477, 0.0
    %v482 = vmax.f32 %v478, 0.0
    %483 = vrot.lane.b32.xlu0 %v479, 17
    %v484 = vpop.permute.xlu0 %483
    %485 = vrot.lane.b32.xlu0 %v480, 17
    %v486 = vpop.permute.xlu0 %485
    %487 = vrot.lane.b32.xlu0 %v481, 17
    %v488 = vpop.permute.xlu0 %487
    %489 = vrot.lane.b32.xlu0 %v482, 17
    %v490 = vpop.permute.xlu0 %489
    %v491 = vsel %vm93, %v488, %v490
    %v492 = vsel %vm93, %v486, %v488
    %v493 = vsel %vm93, %v484, %v486
    %v494 = vsel %vm93, %v490, %v484
    %495 = vrot.lane.b32.xlu0 %v479, 16
    %v496 = vpop.permute.xlu0 %495
    %497 = vrot.lane.b32.xlu0 %v480, 16
    %v498 = vpop.permute.xlu0 %497
    %499 = vrot.lane.b32.xlu0 %v481, 16
    %v500 = vpop.permute.xlu0 %499
    %501 = vrot.lane.b32.xlu0 %v482, 16
    %v502 = vpop.permute.xlu0 %501
    %v503 = vsel %vm106, %v500, %v502
    %v504 = vsel %vm106, %v498, %v500
    %v505 = vsel %vm106, %v496, %v498
    %v506 = vsel %vm106, %v502, %v496
    %507 = vrot.lane.b32.xlu0 %v479, 15
    %v508 = vpop.permute.xlu0 %507
    %509 = vrot.lane.b32.xlu0 %v480, 15
    %v510 = vpop.permute.xlu0 %509
    %511 = vrot.lane.b32.xlu0 %v481, 15
    %v512 = vpop.permute.xlu0 %511
    %513 = vrot.lane.b32.xlu0 %v482, 15
    %v514 = vpop.permute.xlu0 %513
    %v515 = vsel %vm119, %v512, %v514
    %v516 = vsel %vm119, %v510, %v512
    %v517 = vsel %vm119, %v508, %v510
    %v518 = vsel %vm119, %v514, %v508
    %519 = vrot.lane.b32.xlu0 %v479, 1
    %v520 = vpop.permute.xlu0 %519
    %521 = vrot.lane.b32.xlu0 %v480, 1
    %v522 = vpop.permute.xlu0 %521
    %523 = vrot.lane.b32.xlu0 %v481, 1
    %v524 = vpop.permute.xlu0 %523
    %525 = vrot.lane.b32.xlu0 %v482, 1
    %v526 = vpop.permute.xlu0 %525
    %v527 = vsel %vm132, %v524, %v526
    %v528 = vsel %vm132, %v522, %v524
    %v529 = vsel %vm132, %v520, %v522
    %v530 = vsel %vm132, %v526, %v520
    %531 = vrot.lane.b32.xlu0 %v479, 127
    %v532 = vpop.permute.xlu0 %531
    %533 = vrot.lane.b32.xlu0 %v480, 127
    %v534 = vpop.permute.xlu0 %533
    %535 = vrot.lane.b32.xlu0 %v481, 127
    %v536 = vpop.permute.xlu0 %535
    %537 = vrot.lane.b32.xlu0 %v482, 127
    %v538 = vpop.permute.xlu0 %537
    %v539 = vsel %vm145, %v536, %v538
    %v540 = vsel %vm145, %v534, %v536
    %v541 = vsel %vm145, %v532, %v534
    %v542 = vsel %vm145, %v538, %v532
    %543 = vrot.lane.b32.xlu0 %v479, 113
    %v544 = vpop.permute.xlu0 %543
    %545 = vrot.lane.b32.xlu0 %v480, 113
    %v546 = vpop.permute.xlu0 %545
    %547 = vrot.lane.b32.xlu0 %v481, 113
    %v548 = vpop.permute.xlu0 %547
    %549 = vrot.lane.b32.xlu0 %v482, 113
    %v550 = vpop.permute.xlu0 %549
    %v551 = vsel %vm158, %v548, %v550
    %v552 = vsel %vm158, %v546, %v548
    %v553 = vsel %vm158, %v544, %v546
    %v554 = vsel %vm158, %v550, %v544
    %555 = vrot.lane.b32.xlu0 %v479, 112
    %v556 = vpop.permute.xlu0 %555
    %557 = vrot.lane.b32.xlu0 %v480, 112
    %v558 = vpop.permute.xlu0 %557
    %559 = vrot.lane.b32.xlu0 %v481, 112
    %v560 = vpop.permute.xlu0 %559
    %561 = vrot.lane.b32.xlu0 %v482, 112
    %v562 = vpop.permute.xlu0 %561
    %v563 = vsel %vm171, %v560, %v562
    %v564 = vsel %vm171, %v558, %v560
    %v565 = vsel %vm171, %v556, %v558
    %v566 = vsel %vm171, %v562, %v556
    %567 = vrot.lane.b32.xlu0 %v479, 111
    %v568 = vpop.permute.xlu0 %567
    %569 = vrot.lane.b32.xlu0 %v480, 111
    %v570 = vpop.permute.xlu0 %569
    %571 = vrot.lane.b32.xlu0 %v481, 111
    %v572 = vpop.permute.xlu0 %571
    %573 = vrot.lane.b32.xlu0 %v482, 111
    %v574 = vpop.permute.xlu0 %573
    %v575 = vsel %vm184, %v572, %v574
    %v576 = vsel %vm184, %v570, %v572
    %v577 = vsel %vm184, %v568, %v570
    %v578 = vsel %vm184, %v574, %v568
    %v583 = vrot.slane %v506, 4
    %v584 = vrot.slane %v505, 4
    %v585 = vrot.slane %v504, 4
    %v586 = vrot.slane %v503, 4
    %v595 = vrot.slane %v530, 4
    %v596 = vrot.slane %v529, 4
    %v597 = vrot.slane %v528, 4
    %v598 = vrot.slane %v527, 4
    %v607 = vrot.slane %v541, 4
    %v608 = vrot.slane %v540, 4
    %v609 = vrot.slane %v539, 4
    %v610 = vrot.slane %v542, 4
    %v619 = vrot.slane %v565, 4
    %v620 = vrot.slane %v564, 4
    %v621 = vrot.slane %v563, 4
    %v622 = vrot.slane %v566, 4
    %v627 = vsel %vm237, %v494, %v583
    %v628 = vsel %vm237, %v493, %v584
    %v629 = vsel %vm237, %v492, %v585
    %v630 = vsel %vm237, %v491, %v586
    %v631 = vsel %vm237, %v518, %v595
    %v632 = vsel %vm237, %v517, %v596
    %v633 = vsel %vm237, %v516, %v597
    %v634 = vsel %vm237, %v515, %v598
    %v635 = vsel %vm237, %v479, %v607
    %v636 = vsel %vm237, %v480, %v608
    %v637 = vsel %vm237, %v481, %v609
    %v638 = vsel %vm237, %v482, %v610
    %v639 = vsel %vm237, %v553, %v619
    %v640 = vsel %vm237, %v552, %v620
    %v641 = vsel %vm237, %v551, %v621
    %v642 = vsel %vm237, %v554, %v622
    %v643 = vmul.f32 %v627, %v57
    %v644 = vmul.f32 %v628, %v58
    %v645 = vmul.f32 %v629, %v59
    %v646 = vmul.f32 %v630, %v60
    %v647 = vmul.f32 %v631, %v61
    %v648 = vmul.f32 %v632, %v62
    %v649 = vmul.f32 %v633, %v63
    %v650 = vmul.f32 %v634, %v64
    %v651 = vmul.f32 %v635, %v65
    %v652 = vmul.f32 %v636, %v66
    %v653 = vmul.f32 %v637, %v67
    %v654 = vmul.f32 %v638, %v68
    %v655 = vmul.f32 %v639, %v69
    %v656 = vmul.f32 %v640, %v70
    %v657 = vmul.f32 %v641, %v71
    %v658 = vmul.f32 %v642, %v72
    %v659 = vmul.f32 %v577, %v73
    %v660 = vmul.f32 %v576, %v74
    %v661 = vmul.f32 %v575, %v75
    %v662 = vmul.f32 %v578, %v76
    %v663 = vld [vmem:[%s2] sm:$0xf]
    %v665 = vsel %vm275, %v663, 0
    %v668 = vsel %vm237, %v659, 0
    %v671 = vsel %vm237, %v660, 0
    %v674 = vsel %vm237, %v661, 0
    %v677 = vsel %vm237, %v662, 0
    %679 = vmatprep.subr.mxu0 %v644
    %680 = vmatpush1.msra.mxu0 %v643
    %681 = vmatprep.subr.mxu0 %v648
    %682 = vmatpush1.msra.mxu0 %v647
    %683 = vmatprep.subr.mxu0 %v652
    %684 = vmatpush1.msra.mxu0 %v651
    %685 = vmatprep.subr.mxu0 %v656
    %686 = vmatpush1.msra.mxu0 %v655
    %687 = vmatprep.subr.mxu0 %v671
    %688 = vmatpush1.msra.mxu0 %v668
    %689 = vmatprep.subr.mxu0 0.0
    %690 = vmatpush1.msra.mxu0 0.0
    %691 = vmatprep.subr.mxu0 0.0
    %692 = vmatpush1.msra.mxu0 0.0
    %693 = vmatprep.subr.mxu0 0.0
    %694 = vmatpush1.msra.mxu0 0.0
    %695 = vmatprep.subr.mxu0 0.0
    %696 = vmatpush1.msra.mxu0 0.0
    %697 = vmatprep.subr.mxu0 0.0
    %698 = vmatpush1.msra.mxu0 0.0
    %699 = vmatprep.subr.mxu0 0.0
    %700 = vmatpush1.msra.mxu0 0.0
    %701 = vmatprep.subr.mxu0 0.0
    %702 = vmatpush1.msra.mxu0 0.0
    %703 = vmatprep.subr.mxu0 0.0
    %704 = vmatpush1.msra.mxu0 0.0
    %705 = vmatprep.subr.mxu0 0.0
    %706 = vmatpush1.msra.mxu0 0.0
    %707 = vmatprep.subr.mxu0 0.0
    %708 = vmatpush1.msra.mxu0 0.0
    %709 = vmatprep.subr.mxu0 0.0
    %710 = vmatpush1.msra.mxu0 0.0
    %711 = vmatprep.subr.mxu0 0.0
    %712 = vmatpush1.msra.mxu0 0.0
    %713 = vmatprep.subr.mxu0 0.0
    %714 = vmatpush1.msra.mxu0 0.0
    %715 = vmatprep.subr.mxu0 0.0
    %716 = vmatpush1.msra.mxu0 0.0
    %717 = vmatprep.subr.mxu0 0.0
    %718 = vmatpush1.msra.mxu0 0.0
    %719 = vmatprep.subr.mxu0 0.0
    %720 = vmatpush1.msra.mxu0 0.0
    %721 = vmatprep.subr.mxu0 0.0
    %722 = vmatpush1.msra.mxu0 0.0
    %723 = vmatprep.subr.mxu0 0.0
    %724 = vmatpush1.msra.mxu0 0.0
    %725 = vmatprep.subr.mxu0 0.0
    %726 = vmatpush1.msra.mxu0 0.0
    %727 = vmatprep.subr.mxu0 0.0
    %728 = vmatpush1.msra.mxu0 0.0
    %729 = vmatprep.subr.mxu0 0.0
    %730 = vmatpush1.msra.mxu0 0.0
    %731 = vmatprep.subr.mxu0 0.0
    %732 = vmatpush1.msra.mxu0 0.0
    %733 = vmatprep.subr.mxu0 0.0
    %734 = vmatpush1.msra.mxu0 0.0
    %735 = vmatprep.subr.mxu0 0.0
    %736 = vmatpush1.msra.mxu0 0.0
    %737 = vmatprep.subr.mxu0 0.0
    %738 = vmatpush1.msra.mxu0 0.0
    %739 = vmatprep.subr.mxu0 0.0
    %740 = vmatpush1.msra.mxu0 0.0
    %741 = vmatprep.subr.mxu0 0.0
    %742 = vmatpush1.msra.mxu0 0.0
    %743 = vmatprep.mubr.f32.mxu0 0.0
    %744 = vmatmul.mubr.f32.gmra.mrb[0].mxu0 %v665
    %v745 = vpop.f32.mrb[0].mxu0
    %v746 = vadd.f32 0.0, %v745
    %v747 = vpop.f32.mrb[0].mxu0
    %v748 = vadd.f32 0.0, %v747
    %749 = vdwg.mxu0
    %750 = vmatprep.subr.mxu0 %v646
    %751 = vmatpush1.msra.mxu0 %v645
    %752 = vmatprep.subr.mxu0 %v650
    %753 = vmatpush1.msra.mxu0 %v649
    %754 = vmatprep.subr.mxu0 %v654
    %755 = vmatpush1.msra.mxu0 %v653
    %756 = vmatprep.subr.mxu0 %v658
    %757 = vmatpush1.msra.mxu0 %v657
    %758 = vmatprep.subr.mxu0 %v677
    %759 = vmatpush1.msra.mxu0 %v674
    %760 = vmatprep.subr.mxu0 0.0
    %761 = vmatpush1.msra.mxu0 0.0
    %762 = vmatprep.subr.mxu0 0.0
    %763 = vmatpush1.msra.mxu0 0.0
    %764 = vmatprep.subr.mxu0 0.0
    %765 = vmatpush1.msra.mxu0 0.0
    %766 = vmatprep.subr.mxu0 0.0
    %767 = vmatpush1.msra.mxu0 0.0
    %768 = vmatprep.subr.mxu0 0.0
    %769 = vmatpush1.msra.mxu0 0.0
    %770 = vmatprep.subr.mxu0 0.0
    %771 = vmatpush1.msra.mxu0 0.0
    %772 = vmatprep.subr.mxu0 0.0
    %773 = vmatpush1.msra.mxu0 0.0
    %774 = vmatprep.subr.mxu0 0.0
    %775 = vmatpush1.msra.mxu0 0.0
    %776 = vmatprep.subr.mxu0 0.0
    %777 = vmatpush1.msra.mxu0 0.0
    %778 = vmatprep.subr.mxu0 0.0
    %779 = vmatpush1.msra.mxu0 0.0
    %780 = vmatprep.subr.mxu0 0.0
    %781 = vmatpush1.msra.mxu0 0.0
    %782 = vmatprep.subr.mxu0 0.0
    %783 = vmatpush1.msra.mxu0 0.0
    %784 = vmatprep.subr.mxu0 0.0
    %785 = vmatpush1.msra.mxu0 0.0
    %786 = vmatprep.subr.mxu0 0.0
    %787 = vmatpush1.msra.mxu0 0.0
    %788 = vmatprep.subr.mxu0 0.0
    %789 = vmatpush1.msra.mxu0 0.0
    %790 = vmatprep.subr.mxu0 0.0
    %791 = vmatpush1.msra.mxu0 0.0
    %792 = vmatprep.subr.mxu0 0.0
    %793 = vmatpush1.msra.mxu0 0.0
    %794 = vmatprep.subr.mxu0 0.0
    %795 = vmatpush1.msra.mxu0 0.0
    %796 = vmatprep.subr.mxu0 0.0
    %797 = vmatpush1.msra.mxu0 0.0
    %798 = vmatprep.subr.mxu0 0.0
    %799 = vmatpush1.msra.mxu0 0.0
    %800 = vmatprep.subr.mxu0 0.0
    %801 = vmatpush1.msra.mxu0 0.0
    %802 = vmatprep.subr.mxu0 0.0
    %803 = vmatpush1.msra.mxu0 0.0
    %804 = vmatprep.subr.mxu0 0.0
    %805 = vmatpush1.msra.mxu0 0.0
    %806 = vmatprep.subr.mxu0 0.0
    %807 = vmatpush1.msra.mxu0 0.0
    %808 = vmatprep.subr.mxu0 0.0
    %809 = vmatpush1.msra.mxu0 0.0
    %810 = vmatprep.subr.mxu0 0.0
    %811 = vmatpush1.msra.mxu0 0.0
    %812 = vmatprep.subr.mxu0 0.0
    %813 = vmatpush1.msra.mxu0 0.0
    %814 = vmatprep.mubr.f32.mxu0 0.0
    %815 = vmatmul.mubr.f32.gmra.mrb[0].mxu0 %v665
    %v816 = vpop.f32.mrb[0].mxu0
    %v817 = vadd.f32 0.0, %v816
    %v818 = vpop.f32.mrb[0].mxu0
    %v819 = vadd.f32 0.0, %v818
    %820 = vdwg.mxu0
    %v821 = vsel %vm237, %v746, 0.0
    %v822 = vsel %vm237, %v748, 0.0
    %v823 = vadd.f32 %v821, %v822
    %824 = vadd.xlane.f32.xlu0 %v823
    %v825 = vpop.xlane.xlu0 %824
    %v826 = vmul.f32 %v746, %v746
    %v827 = vmul.f32 %v748, %v748
    %v828 = vsel %vm237, %v826, 0.0
    %v829 = vsel %vm237, %v827, 0.0
    %v830 = vadd.f32 %v828, %v829
    %831 = vadd.xlane.f32.xlu0 %v830
    %v832 = vpop.xlane.xlu0 %831
    %v833 = vmul.f32 %v825, 0.00390625
    %v834 = vmul.f32 %v832, 0.00390625
    %v835 = vmul.f32 %v833, %v833
    %v836 = vsub.f32 %v834, %v835
    %v837 = vmax.f32 %v836, 0.0
    %v838 = vsub.f32 %v746, %v833
    %v839 = vsub.f32 %v748, %v833
    %v840 = vadd.f32 %v837, 1e-05
    %v841 = vrsqrt.pop %v840
    %v842 = vmul.f32 %v838, %v841
    %v843 = vmul.f32 %v839, %v841
    %v844 = vsel %vm237, %v817, 0.0
    %v845 = vsel %vm237, %v819, 0.0
    %v846 = vadd.f32 %v844, %v845
    %847 = vadd.xlane.f32.xlu0 %v846
    %v848 = vpop.xlane.xlu0 %847
    %v849 = vmul.f32 %v817, %v817
    %v850 = vmul.f32 %v819, %v819
    %v851 = vsel %vm237, %v849, 0.0
    %v852 = vsel %vm237, %v850, 0.0
    %v853 = vadd.f32 %v851, %v852
    %854 = vadd.xlane.f32.xlu0 %v853
    %v855 = vpop.xlane.xlu0 %854
    %v856 = vmul.f32 %v848, 0.00390625
    %v857 = vmul.f32 %v855, 0.00390625
    %v858 = vmul.f32 %v856, %v856
    %v859 = vsub.f32 %v857, %v858
    %v860 = vmax.f32 %v859, 0.0
    %v861 = vsub.f32 %v817, %v856
    %v862 = vsub.f32 %v819, %v856
    %v863 = vadd.f32 %v860, 1e-05
    %v864 = vrsqrt.pop %v863
    %v865 = vmul.f32 %v861, %v864
    %v866 = vmul.f32 %v862, %v864
    %v867 = vadd.f32 %v842, %v55
    %v868 = vadd.f32 %v843, %v79
    %v869 = vadd.f32 %v865, %v56
    %v870 = vadd.f32 %v866, %v80
    %v875 = vcombine.low %v867, %v868
    %v876 = vcombine.low %v869, %v870
    %879 = vst [vmem:[#allocation8] sm:$0xff] %v875
    %880 = vst [vmem:[#allocation8 + $0x8] sm:$0xff] %v876
    // Predicated region
    $region30: #{tpu_custom_call.1} parent=1 // pred_check
      _
    $region31: #{tpu_custom_call.1} parent=1 // pred_check_branch
      %882 = sbr.rel (0) target = $region33
    $region32: #{tpu_custom_call.1} parent=1 // pred_region
      %s884 = ssub.s32 256, 256
      %885 = vsyncadd [#allocation4], %s884
      %s887 = sshll.u32 [#allocation8], 4
      %s888 = int_to_ptr.vmem [resolvable:$true] %s887
      %890 = dma.vmem_to_hbm [thread:$0]  %s888, 256, %s4, [#allocation4]
    $region33: #{tpu_custom_call.1} parent=1 // pred_fallthru
      _
    // Predicated region
    $region34: #{tpu_custom_call.1} parent=1 // pred_check
      _
    $region35: #{tpu_custom_call.1} parent=1 // pred_check_branch
      %892 = sbr.rel (0) target = $region37
    $region36: #{tpu_custom_call.1} parent=1 // pred_region
      %893 = dma.done [#allocation4], 256
    $region37: #{tpu_custom_call.1} parent=1 // pred_fallthru
      _
    %894 = vsyncpa [#allocation3], 1
    %895 = vsyncpa [#allocation6], 1
    %896 = vsyncpa [#allocation4], 1

</llo_original>
